<compile_context>
chip_gen: v7x
topology: tpu7x:2x2x1
jax: 0.10.0
libtpu: 0.0.40
codegen_flags: <defaults>
</compile_context>

<pallas_src>
import functools
import numpy as np
import jax
import jax.numpy as jnp
from jax.experimental import pallas as pl
from jax.experimental.pallas import tpu as pltpu

_LANE = 128


def _pick_tile_n(N, H, C, vmem_budget_bytes=24 << 20):
    """Rows per grid step.

    - Small N: one full-array block (no padding, no ragged edge; block dims
      equal the array dims so the (8,128) constraint is moot).
    - Large N: multiple-of-128 tiles targeting 512-1024 rows (HBM-roofline
      sweet spot on v5e/v6e), bounded by a VMEM budget that also fits v7x's
      64 MiB, and keeping >=4 grid steps when N permits (>=2 per TensorCore
      with the grid axis marked "parallel")."""
    if N <= 512:
        return N

    def vmem_bytes(t):
        streamed = 2 * (t * H * 2 + C * t * 4 + t * 4 + t * 4)   # double-buffered streams
        resident = 2 * (H * C * 2 + C * 4)                       # worst-case resident W/b
        return streamed + resident

    tile = 1024
    while tile > _LANE and vmem_bytes(tile) > vmem_budget_bytes:
        tile //= 2
    while tile > _LANE and pl.cdiv(N, tile) < 4:
        tile //= 2
    return tile


def prepare_teacher(teacher_logits, temperature):
    """One-time precompute on the static `teacher_logits` registered buffer:
    p = softmax(t / T) and its per-row negative entropy sum(p * log p).
    Removes all teacher-side exp/log/max/reduce work from the per-forward
    kernel at no extra HBM cost (p replaces the raw logits stream, plus one
    scalar per row)."""
    t = jnp.asarray(teacher_logits, jnp.float32) * (1.0 / float(temperature))
    log_p = jax.nn.log_softmax(t, axis=-1)
    p = jnp.exp(log_p)
    neg_ent = jnp.sum(p * log_p, axis=-1)
    # TODO(synk): for large label counts C, store p in bf16 to halve the (N, C)
    # HBM stream; at C ~ 4 it is negligible and f32 keeps the KL check tight.
    return p, neg_ent


def _glitter_kl_kernel(feats_ref, wt_ref, b_ref, p_ref, ne_ref, dist_ref,
                       *, inv_temperature):
    # Student classifier on the MXU: NT matmul  W^T(C,H) . feats(tile_n,H)^T,
    # contracting H, f32 accumulation.  The (C, tile_n) result keeps tile_n on
    # the 128-lane axis, so the small-C softmax/KL vector math runs at full
    # lane occupancy and the per-row KL lands directly in the lane-dense
    # (1, tile_n) output block.
    logits_t = jax.lax.dot_general(
        wt_ref[...], feats_ref[...],
        dimension_numbers=(((1,), (1,)), ((), ())),
        preferred_element_type=jnp.float32)                       # (C, tile_n)

    s = (logits_t + b_ref[...]) * inv_temperature                 # student logits / T
    s_shift = s - jnp.max(s, axis=0, keepdims=True)
    log_q = s_shift - jnp.log(jnp.sum(jnp.exp(s_shift), axis=0, keepdims=True))

    # Teacher side precomputed offline:  p = softmax(tea/T), ne = sum(p*log p),
    # so  KL(p || q) = ne - sum(p * log q)  — no teacher exp/log/max here.
    p = p_ref[...]                                                # (C, tile_n) f32
    cross = jnp.sum(p * log_q, axis=0, keepdims=True)             # (1, tile_n)
    dist_ref[...] = ne_ref[...] - cross


def glitter_distances(feats, w, b, tea_p, tea_neg_ent, temperature):
    """Per-candidate KL(teacher || student) via a fused Pallas kernel.

    feats       : (N, H)  pooled student features (bf16 preferred, cast once upstream)
    w, b        : (H, C), (C,) student classifier head
    tea_p       : (N, C)  precomputed softmax(teacher_logits / T)   (f32)
    tea_neg_ent : (N,)    precomputed sum(p * log p) per row        (f32)
    """
    N, H = feats.shape
    C = w.shape[-1]
    tile_n = _pick_tile_n(N, H, C)
    n_tiles = pl.cdiv(N, tile_n)

    feats_bf = feats if feats.dtype == jnp.bfloat16 else feats.astype(jnp.bfloat16)
    w_t = jnp.asarray(w, jnp.bfloat16).T                    # (C, H), tiny one-time transpose
    b_col = jnp.asarray(b, jnp.float32).reshape(C, 1)
    p_t = jnp.asarray(tea_p, jnp.float32).T                 # (C, N): tile_n on the lane axis
    ne_row = jnp.asarray(tea_neg_ent, jnp.float32).reshape(1, N)

    # Explicit scoped-VMEM request from actual buffer sizes (+headroom), capped
    # below v7x's 64 MiB physical VMEM.
    est = (2 * (tile_n * H * 2 + C * tile_n * 4 + tile_n * 4 + tile_n * 4)
           + 2 * (H * C * 2 + C * 4))
    vmem_limit = int(min(64 << 20, max(16 << 20, 2 * est + (2 << 20))))

    cparams = pltpu.CompilerParams(
        dimension_semantics=("parallel",),
        vmem_limit_bytes=vmem_limit,
    )
    # TODO(synk): consider allow_input_fusion so XLA fuses the bf16 cast /
    # teacher gather directly into the pallas_call inputs.

    cost = pl.CostEstimate(
        flops=2 * N * H * C,
        transcendentals=N * (C + 1),          # one exp pass + one log per row
        bytes_accessed=(N * H * 2 + H * C * 2 + C * 4
                        + N * C * 4 + N * 4 + N * 4),
    )

    kernel = functools.partial(_glitter_kl_kernel,
                               inv_temperature=float(1.0 / temperature))

    # TODO(synk): for large C (H*C bf16 approaching ~16-32 MiB), add a grid axis
    # over C with online log-sum-exp scratch (flash-softmax style) so W and the
    # logits tile need not be fully resident inside v7x's 64 MiB VMEM.
    def build(single_buffer_const):
        const_kw = ({"pipeline_mode": pl.Buffered(1)}
                    if single_buffer_const else {})
        grid_spec = pltpu.PrefetchScalarGridSpec(
            num_scalar_prefetch=0,
            grid=(n_tiles,),
            in_specs=[
                pl.BlockSpec((tile_n, H), lambda i: (i, 0)),          # feats tile (bf16, streamed)
                pl.BlockSpec((C, H), lambda i: (0, 0), **const_kw),   # W^T (bf16, resident)
                pl.BlockSpec((C, 1), lambda i: (0, 0), **const_kw),   # bias (f32, resident)
                pl.BlockSpec((C, tile_n), lambda i: (0, i)),          # teacher softmax tile
                pl.BlockSpec((1, tile_n), lambda i: (0, i)),          # teacher -entropy tile
            ],
            out_specs=pl.BlockSpec((1, tile_n), lambda i: (0, i)),    # lane-dense distances
        )
        return pl.pallas_call(
            kernel,
            out_shape=jax.ShapeDtypeStruct((1, N), jnp.float32),
            grid_spec=grid_spec,
            compiler_params=cparams,
            cost_estimate=cost,
        )

    try:
        dist2d = build(True)(feats_bf, w_t, b_col, p_t, ne_row)
    except Exception:
        # pl.Buffered(1) (single-buffered resident weight/bias) unsupported on
        # this JAX version -> fall back to default double-buffering.
        dist2d = build(False)(feats_bf, w_t, b_col, p_t, ne_row)

    return dist2d.reshape(N)


def select_by_rank(distances, nn_mask, num_groups, augment_rank):
    """Replicates the torch_scatter.scatter_max selection loop in GlitterHead.forward."""
    N = distances.shape[0]
    iota = jnp.arange(N)
    onehot = nn_mask[None, :] == jnp.arange(num_groups)[:, None]   # (G, N)
    dists = distances
    idx = val = valid = None
    for j in range(augment_rank):
        masked = jnp.where(onehot, dists[None, :], -jnp.inf)
        val = jnp.max(masked, axis=1)            # scatter_max values
        idx = jnp.argmax(masked, axis=1)         # scatter_max arg indices
        if j > 0:
            valid = (val != 0) & ~jnp.isinf(val)
        else:
            valid = jnp.ones_like(val, dtype=bool)
        hit = jnp.any((iota[None, :] == idx[:, None]) & valid[:, None], axis=0)
        dists = jnp.where(hit, -jnp.inf, dists)  # distances[_indices] = -inf
    return idx, val, valid


if __name__ == "__main__":
    key = jax.random.PRNGKey(0)

    # Small shapes consistent with the module's forward.
    E, A, C = 4, 4, 4          # teacher_logits buffer: (E, A+1, C) -> [:, 1:] -> (E, A, C)
    B = 2                      # original examples in the batch (len(example_indices))
    N = 16                     # augmented candidates (rows of input_ids)
    S, V, H = 8, 32, 32        # seq len, vocab, hidden
    temperature = 2.0
    augment_rank = 2

    keys = jax.random.split(key, 8)

    # register_buffer('teacher_logits', teacher_logits[:, 1:])
    teacher_logits_full = jax.random.normal(keys[0], (E, A + 1, C), dtype=jnp.float32)
    teacher_logits = teacher_logits_full[:, 1:]

    # TODO(synk): the real student is an arbitrary HuggingFace PreTrainedModel; it is
    # replaced here by a synthetic embedding + masked-mean-pool + linear classifier.
    emb = 0.1 * jax.random.normal(keys[1], (V, H), dtype=jnp.float32)
    w = 0.1 * jax.random.normal(keys[2], (H, C), dtype=jnp.float32)
    b = jnp.zeros((C,), dtype=jnp.float32)

    input_ids = jax.random.randint(keys[3], (N, S), 0, V)
    attention_mask = jnp.ones((N, S), dtype=jnp.float32)
    example_indices = jnp.array([1, 3], dtype=jnp.int32)                   # (B,)
    nn_mask = jnp.repeat(jnp.arange(B, dtype=jnp.int32), N // B)           # group id per candidate
    augmented_indices = jax.random.randint(keys[4], (N,), 0, A)
    nn_ranks = jnp.arange(N, dtype=jnp.int32) % (N // B)

    # --- one-time teacher precompute (teacher_logits is a static registered buffer) ---
    tea_p_full, tea_ne_full = prepare_teacher(teacher_logits, temperature)

    # --- glue: synthetic student pooled features (embedding + masked mean pool),
    #           emitted in bf16 once (no extra cast/pad HBM pass downstream) ---
    tok_emb = emb[input_ids]                                               # (N, S, H)
    mask = attention_mask[..., None]
    feats_f32 = (tok_emb * mask).sum(1) / jnp.maximum(mask.sum(1), 1.0)    # (N, H)
    feats = feats_f32.astype(jnp.bfloat16)

    # --- glue: teacher gather (precomputed softmax + negative entropy instead of raw logits)
    ei = example_indices[nn_mask]
    p_rows = tea_p_full[ei, augmented_indices, :]                          # (N, C) f32
    ne_rows = tea_ne_full[ei, augmented_indices]                           # (N,)  f32

    # --- Pallas hot path: classifier matmul + per-row KL divergence ---
    distances = glitter_distances(feats, w, b, p_rows, ne_rows, temperature)
    distances = jax.block_until_ready(distances)

    # pure-JAX (f32) reference check (original formula with raw teacher logits);
    # bf16 MXU inputs give tiny differences.
    tea = teacher_logits[ei, augmented_indices, :]                         # (N, C)
    stu_logits = feats_f32 @ w + b[None, :]
    log_q = jax.nn.log_softmax(stu_logits / temperature, axis=-1)
    p = jax.nn.softmax(tea / temperature, axis=-1)
    ref = jnp.sum(p * (jnp.log(p) - log_q), axis=-1)
    assert np.allclose(np.asarray(distances), np.asarray(ref), rtol=1e-2, atol=1e-3)

    # --- glue: scatter_max based selection loop over augment_rank ---
    idx, val, valid = select_by_rank(distances, nn_mask, B, augment_rank)

    # host-side: variable-length filtered indices (matches _indices[(_dists!=0) & ~isinf])
    valid_np = np.asarray(valid)
    selected_indices = np.asarray(idx)[valid_np]
    selected_neighbors = np.asarray(tea)[selected_indices]                 # tea_logits[selected_indices]
    selected_ranks = np.asarray(nn_ranks)[selected_indices]                # nn_ranks[selected_indices]

    assert selected_neighbors.shape == (selected_indices.shape[0], C)
    assert selected_ranks.shape == selected_indices.shape

    print("KERNEL_OK")
</pallas_src>

<mosaic_0001>
module attributes {stable_mosaic.version = 11 : i64} {
  func.func @_glitter_kl_kernel(%arg0: i32, %arg1: memref<16x32xbf16, #tpu.memory_space<vmem>>, %arg2: memref<4x32xbf16, #tpu.memory_space<vmem>>, %arg3: memref<4x1xf32, #tpu.memory_space<vmem>>, %arg4: memref<4x16xf32, #tpu.memory_space<vmem>>, %arg5: memref<1x16xf32, #tpu.memory_space<vmem>>, %arg6: memref<1x16xf32, #tpu.memory_space<vmem>>) attributes {dimension_semantics = [#tpu.dimension_semantics<parallel>], iteration_bounds = array<i64: 1>, scalar_prefetch = 0 : i64, scratch_operands = 0 : i64, tpu.core_type = #tpu.core_type<tc>, window_params = [{transform_indices = @transform_0, window_bounds = array<i64: 16, 32>}, {pipeline_mode = #tpu.pipeline_mode<synchronous>, transform_indices = @transform_1, window_bounds = array<i64: 4, 32>}, {pipeline_mode = #tpu.pipeline_mode<synchronous>, transform_indices = @transform_2, window_bounds = array<i64: 4, 1>}, {transform_indices = @transform_3, window_bounds = array<i64: 4, 16>}, {transform_indices = @transform_4, window_bounds = array<i64: 1, 16>}, {transform_indices = @transform_5, window_bounds = array<i64: 1, 16>}]} {
    %c0 = arith.constant 0 : index
    %c0_0 = arith.constant 0 : index
    %0 = vector.load %arg2[%c0, %c0_0] : memref<4x32xbf16, #tpu.memory_space<vmem>>, vector<4x32xbf16>
    %c0_1 = arith.constant 0 : index
    %c0_2 = arith.constant 0 : index
    %1 = vector.load %arg1[%c0_1, %c0_2] : memref<16x32xbf16, #tpu.memory_space<vmem>>, vector<16x32xbf16>
    %cst = arith.constant dense<0.000000e+00> : vector<4x16xf32>
    %2 = tpu.matmul %0, %1, %cst {dimension_numbers = #tpu.dot_dimension_numbers<[1], [1], [0], [0], [0, 0, 1, 0], [], []>} : vector<4x32xbf16>, vector<16x32xbf16>, vector<4x16xf32> -> vector<4x16xf32>
    %c0_3 = arith.constant 0 : index
    %c0_4 = arith.constant 0 : index
    %3 = vector.load %arg3[%c0_3, %c0_4] : memref<4x1xf32, #tpu.memory_space<vmem>>, vector<4x1xf32>
    %4 = vector.broadcast %3 : vector<4x1xf32> to vector<4x16xf32>
    %5 = arith.addf %2, %4 : vector<4x16xf32>
    %cst_5 = arith.constant 5.000000e-01 : f32
    %6 = vector.broadcast %cst_5 : f32 to vector<4x16xf32>
    %7 = arith.mulf %5, %6 : vector<4x16xf32>
    %cst_6 = arith.constant dense<0xFF800000> : vector<16xf32>
    %8 = vector.multi_reduction <maximumf>, %7, %cst_6 [0] : vector<4x16xf32> to vector<16xf32>
    %9 = vector.shape_cast %8 : vector<16xf32> to vector<1x16xf32>
    %10 = vector.broadcast %9 : vector<1x16xf32> to vector<4x16xf32>
    %11 = arith.subf %7, %10 : vector<4x16xf32>
    %12 = math.exp %11 : vector<4x16xf32>
    %cst_7 = arith.constant dense<0.000000e+00> : vector<16xf32>
    %13 = vector.multi_reduction <add>, %12, %cst_7 [0] : vector<4x16xf32> to vector<16xf32>
    %14 = vector.shape_cast %13 : vector<16xf32> to vector<1x16xf32>
    %15 = math.log %14 : vector<1x16xf32>
    %16 = vector.broadcast %15 : vector<1x16xf32> to vector<4x16xf32>
    %17 = arith.subf %11, %16 : vector<4x16xf32>
    %c0_8 = arith.constant 0 : index
    %c0_9 = arith.constant 0 : index
    %18 = vector.load %arg4[%c0_8, %c0_9] : memref<4x16xf32, #tpu.memory_space<vmem>>, vector<4x16xf32>
    %19 = arith.mulf %18, %17 : vector<4x16xf32>
    %cst_10 = arith.constant dense<0.000000e+00> : vector<16xf32>
    %20 = vector.multi_reduction <add>, %19, %cst_10 [0] : vector<4x16xf32> to vector<16xf32>
    %21 = vector.shape_cast %20 : vector<16xf32> to vector<1x16xf32>
    %c0_11 = arith.constant 0 : index
    %c0_12 = arith.constant 0 : index
    %22 = vector.load %arg5[%c0_11, %c0_12] : memref<1x16xf32, #tpu.memory_space<vmem>>, vector<1x16xf32>
    %23 = arith.subf %22, %21 : vector<1x16xf32>
    %c0_13 = arith.constant 0 : index
    %c0_14 = arith.constant 0 : index
    %24 = vector.load %arg6[%c0_13, %c0_14] : memref<1x16xf32, #tpu.memory_space<vmem>>, vector<1x16xf32>
    tpu.vector_store %arg6[%c0_13, %c0_14], %23 {strides = array<i32>} : memref<1x16xf32, #tpu.memory_space<vmem>>, vector<1x16xf32>,
    return
  }
  func.func @transform_0(%arg0: i32) -> (i32, i32) {
    %c0_i32 = arith.constant 0 : i32
    %c0_i32_0 = arith.constant 0 : i32
    return %arg0, %c0_i32 : i32, i32
  }
  func.func @transform_1(%arg0: i32) -> (i32, i32) {
    %c0_i32 = arith.constant 0 : i32
    %c0_i32_0 = arith.constant 0 : i32
    %c0_i32_1 = arith.constant 0 : i32
    return %c0_i32, %c0_i32_0 : i32, i32
  }
  func.func @transform_2(%arg0: i32) -> (i32, i32) {
    %c0_i32 = arith.constant 0 : i32
    %c0_i32_0 = arith.constant 0 : i32
    %c0_i32_1 = arith.constant 0 : i32
    return %c0_i32, %c0_i32_0 : i32, i32
  }
  func.func @transform_3(%arg0: i32) -> (i32, i32) {
    %c0_i32 = arith.constant 0 : i32
    %c0_i32_0 = arith.constant 0 : i32
    return %c0_i32, %arg0 : i32, i32
  }
  func.func @transform_4(%arg0: i32) -> (i32, i32) {
    %c0_i32 = arith.constant 0 : i32
    %c0_i32_0 = arith.constant 0 : i32
    return %c0_i32, %arg0 : i32, i32
  }
  func.func @transform_5(%arg0: i32) -> (i32, i32) {
    %c0_i32 = arith.constant 0 : i32
    %c0_i32_0 = arith.constant 0 : i32
    return %c0_i32, %arg0 : i32, i32
  }
}

module attributes {stable_mosaic.version = 11 : i64} {
  func.func @_glitter_kl_kernel(%arg0: i32, %arg1: memref<16x32xbf16, #tpu.memory_space<vmem>>, %arg2: memref<4x32xbf16, #tpu.memory_space<vmem>>, %arg3: memref<4x1xf32, #tpu.memory_space<vmem>>, %arg4: memref<4x16xf32, #tpu.memory_space<vmem>>, %arg5: memref<1x16xf32, #tpu.memory_space<vmem>>, %arg6: memref<1x16xf32, #tpu.memory_space<vmem>>) attributes {dimension_semantics = [#tpu.dimension_semantics<parallel>], iteration_bounds = array<i64: 1>, scalar_prefetch = 0 : i64, scratch_operands = 0 : i64, tpu.core_type = #tpu.core_type<tc>, window_params = [{transform_indices = @transform_0, window_bounds = array<i64: 16, 32>}, {pipeline_mode = #tpu.pipeline_mode<synchronous>, transform_indices = @transform_1, window_bounds = array<i64: 4, 32>}, {pipeline_mode = #tpu.pipeline_mode<synchronous>, transform_indices = @transform_2, window_bounds = array<i64: 4, 1>}, {transform_indices = @transform_3, window_bounds = array<i64: 4, 16>}, {transform_indices = @transform_4, window_bounds = array<i64: 1, 16>}, {transform_indices = @transform_5, window_bounds = array<i64: 1, 16>}]} {
    %c0 = arith.constant 0 : index
    %c0_0 = arith.constant 0 : index
    %0 = vector.load %arg2[%c0, %c0_0] : memref<4x32xbf16, #tpu.memory_space<vmem>>, vector<4x32xbf16>
    %c0_1 = arith.constant 0 : index
    %c0_2 = arith.constant 0 : index
    %1 = vector.load %arg1[%c0_1, %c0_2] : memref<16x32xbf16, #tpu.memory_space<vmem>>, vector<16x32xbf16>
    %cst = arith.constant dense<0.000000e+00> : vector<4x16xf32>
    %2 = tpu.matmul %0, %1, %cst {dimension_numbers = #tpu.dot_dimension_numbers<[1], [1], [0], [0], [0, 0, 1, 0], [], []>} : vector<4x32xbf16>, vector<16x32xbf16>, vector<4x16xf32> -> vector<4x16xf32>
    %c0_3 = arith.constant 0 : index
    %c0_4 = arith.constant 0 : index
    %3 = vector.load %arg3[%c0_3, %c0_4] : memref<4x1xf32, #tpu.memory_space<vmem>>, vector<4x1xf32>
    %4 = vector.broadcast %3 : vector<4x1xf32> to vector<4x16xf32>
    %5 = arith.addf %2, %4 : vector<4x16xf32>
    %cst_5 = arith.constant 5.000000e-01 : f32
    %6 = vector.broadcast %cst_5 : f32 to vector<4x16xf32>
    %7 = arith.mulf %5, %6 : vector<4x16xf32>
    %cst_6 = arith.constant dense<0xFF800000> : vector<16xf32>
    %8 = vector.multi_reduction <maximumf>, %7, %cst_6 [0] : vector<4x16xf32> to vector<16xf32>
    %9 = vector.shape_cast %8 : vector<16xf32> to vector<1x16xf32>
    %10 = vector.broadcast %9 : vector<1x16xf32> to vector<4x16xf32>
    %11 = arith.subf %7, %10 : vector<4x16xf32>
    %12 = math.exp %11 : vector<4x16xf32>
    %cst_7 = arith.constant dense<0.000000e+00> : vector<16xf32>
    %13 = vector.multi_reduction <add>, %12, %cst_7 [0] : vector<4x16xf32> to vector<16xf32>
    %14 = vector.shape_cast %13 : vector<16xf32> to vector<1x16xf32>
    %15 = math.log %14 : vector<1x16xf32>
    %16 = vector.broadcast %15 : vector<1x16xf32> to vector<4x16xf32>
    %17 = arith.subf %11, %16 : vector<4x16xf32>
    %c0_8 = arith.constant 0 : index
    %c0_9 = arith.constant 0 : index
    %18 = vector.load %arg4[%c0_8, %c0_9] : memref<4x16xf32, #tpu.memory_space<vmem>>, vector<4x16xf32>
    %19 = arith.mulf %18, %17 : vector<4x16xf32>
    %cst_10 = arith.constant dense<0.000000e+00> : vector<16xf32>
    %20 = vector.multi_reduction <add>, %19, %cst_10 [0] : vector<4x16xf32> to vector<16xf32>
    %21 = vector.shape_cast %20 : vector<16xf32> to vector<1x16xf32>
    %c0_11 = arith.constant 0 : index
    %c0_12 = arith.constant 0 : index
    %22 = vector.load %arg5[%c0_11, %c0_12] : memref<1x16xf32, #tpu.memory_space<vmem>>, vector<1x16xf32>
    %23 = arith.subf %22, %21 : vector<1x16xf32>
    %c0_13 = arith.constant 0 : index
    %c0_14 = arith.constant 0 : index
    %24 = vector.load %arg6[%c0_13, %c0_14] : memref<1x16xf32, #tpu.memory_space<vmem>>, vector<1x16xf32>
    tpu.vector_store %arg6[%c0_13, %c0_14], %23 {strides = array<i32>} : memref<1x16xf32, #tpu.memory_space<vmem>>, vector<1x16xf32>,
    return
  }
  func.func @transform_0(%arg0: i32) -> (i32, i32) {
    %c0_i32 = arith.constant 0 : i32
    %c0_i32_0 = arith.constant 0 : i32
    return %arg0, %c0_i32 : i32, i32
  }
  func.func @transform_1(%arg0: i32) -> (i32, i32) {
    %c0_i32 = arith.constant 0 : i32
    %c0_i32_0 = arith.constant 0 : i32
    %c0_i32_1 = arith.constant 0 : i32
    return %c0_i32, %c0_i32_0 : i32, i32
  }
  func.func @transform_2(%arg0: i32) -> (i32, i32) {
    %c0_i32 = arith.constant 0 : i32
    %c0_i32_0 = arith.constant 0 : i32
    %c0_i32_1 = arith.constant 0 : i32
    return %c0_i32, %c0_i32_0 : i32, i32
  }
  func.func @transform_3(%arg0: i32) -> (i32, i32) {
    %c0_i32 = arith.constant 0 : i32
    %c0_i32_0 = arith.constant 0 : i32
    return %c0_i32, %arg0 : i32, i32
  }
  func.func @transform_4(%arg0: i32) -> (i32, i32) {
    %c0_i32 = arith.constant 0 : i32
    %c0_i32_0 = arith.constant 0 : i32
    return %c0_i32, %arg0 : i32, i32
  }
  func.func @transform_5(%arg0: i32) -> (i32, i32) {
    %c0_i32 = arith.constant 0 : i32
    %c0_i32_0 = arith.constant 0 : i32
    return %c0_i32, %arg0 : i32, i32
  }
}

</mosaic_0001>

<llo_original>
// kernel: tpu_custom_call.1
$region0: #{tpu_custom_call.1}
  #allocation0 [shape = 'u32[]', space=smem, size = 0x4, offset = 0x4, fixed_abs, tag = 'smem constant byte address 0x4 - core index']
  #allocation1 [shape = 'u32[144,128]{1,0:T(1,128)}', space=vmem, size = 0x12000, scoped, tag = 'internal scratch']
  %s0 = inlined_call_operand.hbm [shape: bf16[16,32], index: 0, kind: input, shape index: {}]
  %s1 = inlined_call_operand.vmem [shape: bf16[4,32], index: 1, kind: input, shape index: {}]
  %s2 = inlined_call_operand.vmem [shape: f32[4,1], index: 2, kind: input, shape index: {}]
  %s3 = inlined_call_operand.vmem [shape: f32[4,16], index: 3, kind: input, shape index: {}]
  %s4 = inlined_call_operand.vmem [shape: f32[1,16], index: 4, kind: input, shape index: {}]
  %s5 = inlined_call_operand.hbm [shape: f32[1,16], index: 5, kind: output, shape index: {}]
  %s6 = sld [smem:[#allocation0]]
  $region34: #{tpu_custom_call.1} parent=0
    _
  %s8 = ssub.s32 1, %s6
  %s9 = scalar_select 0, %s8, %s6
  $region1: #{tpu_custom_call.1} parent=0
    #allocation2 [shape = 'u8[4096]{0}', space=vmem, size = 0x1000, scoped, tag = 'input window, operand 0, single buffered']
    #allocation3 [shape = 's32[1]{0}', space=sflag, size = 0x4, scoped, tag = 'scoped memory for tpu_custom_call.1']
    #allocation4 [shape = 's32[1]{0}', space=sflag, size = 0x4, scoped, tag = 'scoped memory for tpu_custom_call.1']
    #allocation5 [shape = 'u8[512]{0}', space=vmem, size = 0x400, scoped, tag = 'output window, operand 0, single buffered']
    %10 = vsyncpa [#allocation3], 0
    %11 = vsyncpa [#allocation4], 0
    // Predicated region
    $region2: #{tpu_custom_call.1} parent=1 // pred_check
      _
    $region3: #{tpu_custom_call.1} parent=1 // pred_check_branch
      %13 = sbr.rel (0) target = $region5
    $region4: #{tpu_custom_call.1} parent=1 // pred_region
      %s15 = ssub.s32 128, 128
      %16 = vsyncadd [#allocation3], %s15
      %s17 = sshll.u32 [#allocation2], 4
      %s18 = int_to_ptr.vmem [resolvable:$true] %s17
      %23 = dma.hbm_to_vmem [thread:$0]  %s0, 128, %s18, [#allocation3], 64, 64, 4
    $region5: #{tpu_custom_call.1} parent=1 // pred_fallthru
      _
    // Predicated region
    $region6: #{tpu_custom_call.1} parent=1 // pred_check
      _
    $region7: #{tpu_custom_call.1} parent=1 // pred_check_branch
      %25 = sbr.rel (0) target = $region9
    $region8: #{tpu_custom_call.1} parent=1 // pred_region
      _
    $region9: #{tpu_custom_call.1} parent=1 // pred_fallthru
      _
    // Predicated region
    $region10: #{tpu_custom_call.1} parent=1 // pred_check
      _
    $region11: #{tpu_custom_call.1} parent=1 // pred_check_branch
      %27 = sbr.rel (0) target = $region13
    $region12: #{tpu_custom_call.1} parent=1 // pred_region
      _
    $region13: #{tpu_custom_call.1} parent=1 // pred_fallthru
      _
    // Predicated region
    $region14: #{tpu_custom_call.1} parent=1 // pred_check
      _
    $region15: #{tpu_custom_call.1} parent=1 // pred_check_branch
      %29 = sbr.rel (0) target = $region17
    $region16: #{tpu_custom_call.1} parent=1 // pred_region
      _
    $region17: #{tpu_custom_call.1} parent=1 // pred_fallthru
      _
    // Predicated region
    $region18: #{tpu_custom_call.1} parent=1 // pred_check
      _
    $region19: #{tpu_custom_call.1} parent=1 // pred_check_branch
      %31 = sbr.rel (0) target = $region21
    $region20: #{tpu_custom_call.1} parent=1 // pred_region
      _
    $region21: #{tpu_custom_call.1} parent=1 // pred_fallthru
      _
    // Predicated region
    $region22: #{tpu_custom_call.1} parent=1 // pred_check
      _
    $region23: #{tpu_custom_call.1} parent=1 // pred_check_branch
      %33 = sbr.rel (0) target = $region25
    $region24: #{tpu_custom_call.1} parent=1 // pred_region
      %34 = dma.done [#allocation3], 128
    $region25: #{tpu_custom_call.1} parent=1 // pred_fallthru
      _
    %v36 = vld [vmem:[%s1] sm:$0x3]
    %v37 = vld [vmem:[#allocation2] sm:$0xf]
    %v38 = vld [vmem:[#allocation2 + $0x4] sm:$0xf]
    %v39 = vld [vmem:[%s2] sm:$0xf]
    %41 = vset.pattern.permute.xlu0 0
    %42 = vperm.xlu0 %41, %v39
    %v43 = vpop.permute.xlu0 %42
    %v47 = vunpack.c.l.b16 %v37
    %v48 = vunpack.c.l.b16 %v38
    %v49 = vpack.c.b16 %v48, %v47
    %vm50 = vcmask 261120
    %v52 = vsel %vm50, %v36, 0
    %v55 = vsel %vm50, %v49, 0
    %57 = vmatprep.subr.bf16.mxu0 0
    %58 = vmatpush1.bf16.xpose.msra.mxu0 %v55
    %59 = vmatprep.subr.bf16.mxu0 0
    %60 = vmatpush1.bf16.xpose.msra.mxu0 0
    %61 = vmatprep.subr.bf16.mxu0 0
    %62 = vmatpush1.bf16.xpose.msra.mxu0 0
    %63 = vmatprep.subr.bf16.mxu0 0
    %64 = vmatpush1.bf16.xpose.msra.mxu0 0
    %65 = vmatprep.subr.bf16.mxu0 0
    %66 = vmatpush1.bf16.xpose.msra.mxu0 0
    %67 = vmatprep.subr.bf16.mxu0 0
    %68 = vmatpush1.bf16.xpose.msra.mxu0 0
    %69 = vmatprep.subr.bf16.mxu0 0
    %70 = vmatpush1.bf16.xpose.msra.mxu0 0
    %71 = vmatprep.subr.bf16.mxu0 0
    %72 = vmatpush1.bf16.xpose.msra.mxu0 0
    %73 = vmatprep.subr.bf16.mxu0 0
    %74 = vmatpush1.bf16.xpose.msra.mxu0 0
    %75 = vmatprep.subr.bf16.mxu0 0
    %76 = vmatpush1.bf16.xpose.msra.mxu0 0
    %77 = vmatprep.subr.bf16.mxu0 0
    %78 = vmatpush1.bf16.xpose.msra.mxu0 0
    %79 = vmatprep.subr.bf16.mxu0 0
    %80 = vmatpush1.bf16.xpose.msra.mxu0 0
    %81 = vmatprep.subr.bf16.mxu0 0
    %82 = vmatpush1.bf16.xpose.msra.mxu0 0
    %83 = vmatprep.subr.bf16.mxu0 0
    %84 = vmatpush1.bf16.xpose.msra.mxu0 0
    %85 = vmatprep.subr.bf16.mxu0 0
    %86 = vmatpush1.bf16.xpose.msra.mxu0 0
    %87 = vmatprep.subr.bf16.mxu0 0
    %88 = vmatpush1.bf16.xpose.msra.mxu0 0
    %89 = vmatprep.mubr.bf16.mxu0 0
    %90 = vmatmul.mubr.bf16.gmra.mrb[0].mxu0 %v52
    %v91 = vpop.f32.mrb[0].mxu0
    %v92 = vadd.f32 %v43, %v91
    %v93 = vpop.f32.mrb[0].mxu0
    %v94 = vpop.f32.mrb[0].mxu0
    %v95 = vpop.f32.mrb[0].mxu0
    %96 = vdwg.mxu0
    %v97 = vmul.f32 %v92, 0.5
    %vm98 = vcmask 125952
    %v99 = vsel %vm98, %v97, -inf
    %v100 = vrot.slane %v99, 4
    %v101 = vmax.f32 %v99, %v100
    %v102 = vrot.slane %v101, 2
    %v103 = vmax.f32 %v101, %v102
    %v104 = vrot.slane %v103, 1
    %v105 = vmax.f32 %v103, %v104
    %v106 = vsub.f32 %v97, %v105
    %v107 = vmul.f32 %v106, 1.442695
    %v108 = vpow.pop %v107
    %v109 = vsel %vm98, %v108, 0.0
    %v110 = vrot.slane %v109, 4
    %v111 = vadd.f32 %v109, %v110
    %v112 = vrot.slane %v111, 2
    %v113 = vadd.f32 %v111, %v112
    %v114 = vrot.slane %v113, 1
    %v115 = vadd.f32 %v113, %v114
    %v116 = vlog2.pop %v115
    %v117 = vmul.f32 %v116, 0.6931472
    %v118 = vsub.f32 %v106, %v117
    %v119 = vld [vmem:[%s3] sm:$0xf]
    %v120 = vmul.f32 %v119, %v118
    %v121 = vsel %vm98, %v120, 0.0
    %v122 = vrot.slane %v121, 4
    %v123 = vadd.f32 %v121, %v122
    %v124 = vrot.slane %v123, 2
    %v125 = vadd.f32 %v123, %v124
    %v126 = vrot.slane %v125, 1
    %v127 = vadd.f32 %v125, %v126
    %v128 = vld [vmem:[%s4] sm:$0x1]
    %v129 = vsub.f32 %v128, %v127
    %vm130 = vcmask 122880
    %131 = vst.msk [vmem:[#allocation5] sm:$0x1] %vm130, %v129
    // Predicated region
    $region26: #{tpu_custom_call.1} parent=1 // pred_check
      _
    $region27: #{tpu_custom_call.1} parent=1 // pred_check_branch
      %133 = sbr.rel (0) target = $region29
    $region28: #{tpu_custom_call.1} parent=1 // pred_region
      %s135 = ssub.s32 16, 16
      %136 = vsyncadd [#allocation4], %s135
      %s138 = sshll.u32 [#allocation5], 4
      %s139 = int_to_ptr.vmem [resolvable:$true] %s138
      %141 = dma.vmem_to_hbm [thread:$0]  %s139, 16, %s5, [#allocation4]
    $region29: #{tpu_custom_call.1} parent=1 // pred_fallthru
      _
    // Predicated region
    $region30: #{tpu_custom_call.1} parent=1 // pred_check
      _
    $region31: #{tpu_custom_call.1} parent=1 // pred_check_branch
      %143 = sbr.rel (0) target = $region33
    $region32: #{tpu_custom_call.1} parent=1 // pred_region
      %144 = dma.done [#allocation4], 16
    $region33: #{tpu_custom_call.1} parent=1 // pred_fallthru
      _
    %145 = vsyncpa [#allocation3], 1
    %146 = vsyncpa [#allocation4], 1

// kernel: tpu_custom_call.1
$region0: #{tpu_custom_call.1}
  #allocation0 [shape = 'u32[]', space=smem, size = 0x4, offset = 0x4, fixed_abs, tag = 'smem constant byte address 0x4 - core index']
  #allocation1 [shape = 'u32[144,128]{1,0:T(1,128)}', space=vmem, size = 0x12000, scoped, tag = 'internal scratch']
  %s0 = inlined_call_operand.hbm [shape: bf16[16,32], index: 0, kind: input, shape index: {}]
  %s1 = inlined_call_operand.vmem [shape: bf16[4,32], index: 1, kind: input, shape index: {}]
  %s2 = inlined_call_operand.vmem [shape: f32[4,1], index: 2, kind: input, shape index: {}]
  %s3 = inlined_call_operand.vmem [shape: f32[4,16], index: 3, kind: input, shape index: {}]
  %s4 = inlined_call_operand.vmem [shape: f32[1,16], index: 4, kind: input, shape index: {}]
  %s5 = inlined_call_operand.hbm [shape: f32[1,16], index: 5, kind: output, shape index: {}]
  %s6 = sld [smem:[#allocation0]]
  $region34: #{tpu_custom_call.1} parent=0
    _
  %s8 = ssub.s32 1, %s6
  %s9 = scalar_select 0, %s8, %s6
  $region1: #{tpu_custom_call.1} parent=0
    #allocation2 [shape = 'u8[4096]{0}', space=vmem, size = 0x1000, scoped, tag = 'input window, operand 0, single buffered']
    #allocation3 [shape = 's32[1]{0}', space=sflag, size = 0x4, scoped, tag = 'scoped memory for tpu_custom_call.1']
    #allocation4 [shape = 's32[1]{0}', space=sflag, size = 0x4, scoped, tag = 'scoped memory for tpu_custom_call.1']
    #allocation5 [shape = 'u8[512]{0}', space=vmem, size = 0x400, scoped, tag = 'output window, operand 0, single buffered']
    %10 = vsyncpa [#allocation3], 0
    %11 = vsyncpa [#allocation4], 0
    // Predicated region
    $region2: #{tpu_custom_call.1} parent=1 // pred_check
      _
    $region3: #{tpu_custom_call.1} parent=1 // pred_check_branch
      %13 = sbr.rel (0) target = $region5
    $region4: #{tpu_custom_call.1} parent=1 // pred_region
      %s15 = ssub.s32 128, 128
      %16 = vsyncadd [#allocation3], %s15
      %s17 = sshll.u32 [#allocation2], 4
      %s18 = int_to_ptr.vmem [resolvable:$true] %s17
      %23 = dma.hbm_to_vmem [thread:$0]  %s0, 128, %s18, [#allocation3], 64, 64, 4
    $region5: #{tpu_custom_call.1} parent=1 // pred_fallthru
      _
    // Predicated region
    $region6: #{tpu_custom_call.1} parent=1 // pred_check
      _
    $region7: #{tpu_custom_call.1} parent=1 // pred_check_branch
      %25 = sbr.rel (0) target = $region9
    $region8: #{tpu_custom_call.1} parent=1 // pred_region
      _
    $region9: #{tpu_custom_call.1} parent=1 // pred_fallthru
      _
    // Predicated region
    $region10: #{tpu_custom_call.1} parent=1 // pred_check
      _
    $region11: #{tpu_custom_call.1} parent=1 // pred_check_branch
      %27 = sbr.rel (0) target = $region13
    $region12: #{tpu_custom_call.1} parent=1 // pred_region
      _
    $region13: #{tpu_custom_call.1} parent=1 // pred_fallthru
      _
    // Predicated region
    $region14: #{tpu_custom_call.1} parent=1 // pred_check
      _
    $region15: #{tpu_custom_call.1} parent=1 // pred_check_branch
      %29 = sbr.rel (0) target = $region17
    $region16: #{tpu_custom_call.1} parent=1 // pred_region
      _
    $region17: #{tpu_custom_call.1} parent=1 // pred_fallthru
      _
    // Predicated region
    $region18: #{tpu_custom_call.1} parent=1 // pred_check
      _
    $region19: #{tpu_custom_call.1} parent=1 // pred_check_branch
      %31 = sbr.rel (0) target = $region21
    $region20: #{tpu_custom_call.1} parent=1 // pred_region
      _
    $region21: #{tpu_custom_call.1} parent=1 // pred_fallthru
      _
    // Predicated region
    $region22: #{tpu_custom_call.1} parent=1 // pred_check
      _
    $region23: #{tpu_custom_call.1} parent=1 // pred_check_branch
      %33 = sbr.rel (0) target = $region25
    $region24: #{tpu_custom_call.1} parent=1 // pred_region
      %34 = dma.done [#allocation3], 128
    $region25: #{tpu_custom_call.1} parent=1 // pred_fallthru
      _
    %v36 = vld [vmem:[%s1] sm:$0x3]
    %v37 = vld [vmem:[#allocation2] sm:$0xf]
    %v38 = vld [vmem:[#allocation2 + $0x4] sm:$0xf]
    %v39 = vld [vmem:[%s2] sm:$0xf]
    %41 = vset.pattern.permute.xlu0 0
    %42 = vperm.xlu0 %41, %v39
    %v43 = vpop.permute.xlu0 %42
    %v47 = vunpack.c.l.b16 %v37
    %v48 = vunpack.c.l.b16 %v38
    %v49 = vpack.c.b16 %v48, %v47
    %vm50 = vcmask 261120
    %v52 = vsel %vm50, %v36, 0
    %v55 = vsel %vm50, %v49, 0
    %57 = vmatprep.subr.bf16.mxu0 0
    %58 = vmatpush1.bf16.xpose.msra.mxu0 %v55
    %59 = vmatprep.subr.bf16.mxu0 0
    %60 = vmatpush1.bf16.xpose.msra.mxu0 0
    %61 = vmatprep.subr.bf16.mxu0 0
    %62 = vmatpush1.bf16.xpose.msra.mxu0 0
    %63 = vmatprep.subr.bf16.mxu0 0
    %64 = vmatpush1.bf16.xpose.msra.mxu0 0
    %65 = vmatprep.subr.bf16.mxu0 0
    %66 = vmatpush1.bf16.xpose.msra.mxu0 0
    %67 = vmatprep.subr.bf16.mxu0 0
    %68 = vmatpush1.bf16.xpose.msra.mxu0 0
    %69 = vmatprep.subr.bf16.mxu0 0
    %70 = vmatpush1.bf16.xpose.msra.mxu0 0
    %71 = vmatprep.subr.bf16.mxu0 0
    %72 = vmatpush1.bf16.xpose.msra.mxu0 0
    %73 = vmatprep.subr.bf16.mxu0 0
    %74 = vmatpush1.bf16.xpose.msra.mxu0 0
    %75 = vmatprep.subr.bf16.mxu0 0
    %76 = vmatpush1.bf16.xpose.msra.mxu0 0
    %77 = vmatprep.subr.bf16.mxu0 0
    %78 = vmatpush1.bf16.xpose.msra.mxu0 0
    %79 = vmatprep.subr.bf16.mxu0 0
    %80 = vmatpush1.bf16.xpose.msra.mxu0 0
    %81 = vmatprep.subr.bf16.mxu0 0
    %82 = vmatpush1.bf16.xpose.msra.mxu0 0
    %83 = vmatprep.subr.bf16.mxu0 0
    %84 = vmatpush1.bf16.xpose.msra.mxu0 0
    %85 = vmatprep.subr.bf16.mxu0 0
    %86 = vmatpush1.bf16.xpose.msra.mxu0 0
    %87 = vmatprep.subr.bf16.mxu0 0
    %88 = vmatpush1.bf16.xpose.msra.mxu0 0
    %89 = vmatprep.mubr.bf16.mxu0 0
    %90 = vmatmul.mubr.bf16.gmra.mrb[0].mxu0 %v52
    %v91 = vpop.f32.mrb[0].mxu0
    %v92 = vadd.f32 %v43, %v91
    %v93 = vpop.f32.mrb[0].mxu0
    %v94 = vpop.f32.mrb[0].mxu0
    %v95 = vpop.f32.mrb[0].mxu0
    %96 = vdwg.mxu0
    %v97 = vmul.f32 %v92, 0.5
    %vm98 = vcmask 125952
    %v99 = vsel %vm98, %v97, -inf
    %v100 = vrot.slane %v99, 4
    %v101 = vmax.f32 %v99, %v100
    %v102 = vrot.slane %v101, 2
    %v103 = vmax.f32 %v101, %v102
    %v104 = vrot.slane %v103, 1
    %v105 = vmax.f32 %v103, %v104
    %v106 = vsub.f32 %v97, %v105
    %v107 = vmul.f32 %v106, 1.442695
    %v108 = vpow.pop %v107
    %v109 = vsel %vm98, %v108, 0.0
    %v110 = vrot.slane %v109, 4
    %v111 = vadd.f32 %v109, %v110
    %v112 = vrot.slane %v111, 2
    %v113 = vadd.f32 %v111, %v112
    %v114 = vrot.slane %v113, 1
    %v115 = vadd.f32 %v113, %v114
    %v116 = vlog2.pop %v115
    %v117 = vmul.f32 %v116, 0.6931472
    %v118 = vsub.f32 %v106, %v117
    %v119 = vld [vmem:[%s3] sm:$0xf]
    %v120 = vmul.f32 %v119, %v118
    %v121 = vsel %vm98, %v120, 0.0
    %v122 = vrot.slane %v121, 4
    %v123 = vadd.f32 %v121, %v122
    %v124 = vrot.slane %v123, 2
    %v125 = vadd.f32 %v123, %v124
    %v126 = vrot.slane %v125, 1
    %v127 = vadd.f32 %v125, %v126
    %v128 = vld [vmem:[%s4] sm:$0x1]
    %v129 = vsub.f32 %v128, %v127
    %vm130 = vcmask 122880
    %131 = vst.msk [vmem:[#allocation5] sm:$0x1] %vm130, %v129
    // Predicated region
    $region26: #{tpu_custom_call.1} parent=1 // pred_check
      _
    $region27: #{tpu_custom_call.1} parent=1 // pred_check_branch
      %133 = sbr.rel (0) target = $region29
    $region28: #{tpu_custom_call.1} parent=1 // pred_region
      %s135 = ssub.s32 16, 16
      %136 = vsyncadd [#allocation4], %s135
      %s138 = sshll.u32 [#allocation5], 4
      %s139 = int_to_ptr.vmem [resolvable:$true] %s138
      %141 = dma.vmem_to_hbm [thread:$0]  %s139, 16, %s5, [#allocation4]
    $region29: #{tpu_custom_call.1} parent=1 // pred_fallthru
      _
    // Predicated region
    $region30: #{tpu_custom_call.1} parent=1 // pred_check
      _
    $region31: #{tpu_custom_call.1} parent=1 // pred_check_branch
      %143 = sbr.rel (0) target = $region33
    $region32: #{tpu_custom_call.1} parent=1 // pred_region
      %144 = dma.done [#allocation4], 16
    $region33: #{tpu_custom_call.1} parent=1 // pred_fallthru
      _
    %145 = vsyncpa [#allocation3], 1
    %146 = vsyncpa [#allocation4], 1

</llo_original>
